<compile_context>
chip_gen: v5e
topology: v5e:2x2
jax: 0.10.0
libtpu: 0.0.40
codegen_flags: <defaults>
</compile_context>

<pallas_src>
import jax
import jax.numpy as jnp
from jax.experimental import pallas as pl
from jax.experimental.pallas import tpu as pltpu

IN_FEATURES = 32
OUT_H = 60
OUT_W = 60
OUT_FEATURES = OUT_H * OUT_W  # 3600


def _round_up(x, m):
    return (x + m - 1) // m * m


def _decoder_fc_kernel(z_ref, w_ref, b_ref, o_ref):
    # z_ref: (TB, 32) f32      w_ref: (32, 3600) bf16 (VMEM-resident: const index_map)
    # b_ref: (1, 3600) f32     o_ref: (TB, 3600) f32
    acc = jnp.dot(
        z_ref[...].astype(jnp.bfloat16),   # native bf16 x bf16 MXU path
        w_ref[...],
        preferred_element_type=jnp.float32,
    )
    o_ref[...] = acc + b_ref[...]


def prepare_params(w, b):
    """w: (32, 3600) f32, b: (3600,) f32 -> bf16 weight, f32 (1, 3600) bias.

    Weight is kept bf16 in HBM to halve the dominant weight DMA. No lane-axis
    padding: 3600 is used directly (block last dim == full array dim).
    """
    wp = w.astype(jnp.bfloat16)
    bp = b.astype(jnp.float32).reshape(1, OUT_FEATURES)
    return wp, bp


def decoder_forward(z, wp, bp):
    """z: (B, 32) f32; wp: (32, 3600) bf16; bp: (1, 3600) f32 -> (B, 60, 60) f32."""
    B = z.shape[0]

    # Batch tile: multiple of 8 sublanes. When the padded batch is >= 16 rows,
    # split into >= 2 grid steps so the "parallel" axis can be sharded across
    # v7x's two TensorCores; cap at 512 rows (double-buffered f32 output tile
    # ~14 MiB -> fits the 32 MiB scoped-VMEM default on v5e/v6e/v7x).
    b_rows0 = _round_up(max(B, 1), 8)
    tb = min(512, max(8, _round_up(pl.cdiv(b_rows0, 2), 8)))
    b_rows = _round_up(B, tb)
    if b_rows != B:
        z = jnp.pad(z, ((0, b_rows - B), (0, 0)))

    grid = (b_rows // tb,)

    cost = pl.CostEstimate(
        flops=2 * b_rows * IN_FEATURES * OUT_FEATURES,
        transcendentals=0,
        bytes_accessed=(
            wp.size * 2                      # bf16 weight, read once
            + bp.size * 4                    # f32 bias, read once
            + b_rows * IN_FEATURES * 4       # z
            + b_rows * OUT_FEATURES * 4      # output
        ),
    )

    h = pl.pallas_call(
        _decoder_fc_kernel,
        out_shape=jax.ShapeDtypeStruct((b_rows, OUT_FEATURES), jnp.float32),
        grid=grid,
        in_specs=[
            pl.BlockSpec((tb, IN_FEATURES), lambda i: (i, 0)),
            pl.BlockSpec((IN_FEATURES, OUT_FEATURES), lambda i: (0, 0)),
            pl.BlockSpec((1, OUT_FEATURES), lambda i: (0, 0)),
        ],
        out_specs=pl.BlockSpec((tb, OUT_FEATURES), lambda i: (i, 0)),
        compiler_params=pltpu.CompilerParams(
            dimension_semantics=("parallel",),
        ),
        cost_estimate=cost,
    )(z, wp, bp)

    # nn.Unflatten(1, (60, 60)): drop batch padding (contiguous), pure reshape.
    return h[:B].reshape(B, OUT_H, OUT_W)


def init_params(key):
    # Deterministic synthetic init mirroring nn.Linear(32, 3600):
    # PyTorch uses U(-1/sqrt(fan_in), 1/sqrt(fan_in)) for weight and bias.
    kw, kb = jax.random.split(key)
    bound = 1.0 / jnp.sqrt(jnp.float32(IN_FEATURES))
    # Stored transposed relative to torch ((out,in) -> (in,out)) so the kernel
    # does z @ W directly.
    w = jax.random.uniform(
        kw, (IN_FEATURES, OUT_FEATURES), jnp.float32, -bound, bound
    )
    b = jax.random.uniform(kb, (OUT_FEATURES,), jnp.float32, -bound, bound)
    return w, b


if __name__ == "__main__":
    key = jax.random.PRNGKey(0)
    kz, kp = jax.random.split(key)

    B = 2
    z = jax.random.normal(kz, (B, IN_FEATURES), jnp.float32)
    w, b = init_params(kp)
    wp, bp = prepare_params(w, b)

    fwd = jax.jit(decoder_forward)
    out = jax.block_until_ready(fwd(z, wp, bp))

    # Reference in plain JAX using the same bf16-quantized operands (z and W are
    # bf16 on the MXU; accumulation and bias-add are f32), matching the kernel.
    z_eff = z.astype(jnp.bfloat16).astype(jnp.float32)
    w_eff = wp.astype(jnp.float32)
    ref = (z_eff @ w_eff + bp[0]).reshape(B, OUT_H, OUT_W)

    assert out.shape == (B, OUT_H, OUT_W), out.shape
    assert jnp.allclose(out, ref, atol=1e-3, rtol=1e-3), float(
        jnp.max(jnp.abs(out - ref))
    )

    print("KERNEL_OK")
</pallas_src>

<mosaic_0001>
module attributes {stable_mosaic.version = 11 : i64} {
  func.func @_decoder_fc_kernel(%arg0: i32, %arg1: memref<8x32xf32, #tpu.memory_space<vmem>>, %arg2: memref<32x3600xbf16, #tpu.memory_space<vmem>>, %arg3: memref<1x3600xf32, #tpu.memory_space<vmem>>, %arg4: memref<8x3600xf32, #tpu.memory_space<vmem>>) attributes {dimension_semantics = [#tpu.dimension_semantics<parallel>], iteration_bounds = array<i64: 1>, scalar_prefetch = 0 : i64, scratch_operands = 0 : i64, tpu.core_type = #tpu.core_type<tc>, window_params = [{transform_indices = @transform_0, window_bounds = array<i64: 8, 32>}, {pipeline_mode = #tpu.pipeline_mode<synchronous>, transform_indices = @transform_1, window_bounds = array<i64: 32, 3600>}, {pipeline_mode = #tpu.pipeline_mode<synchronous>, transform_indices = @transform_2, window_bounds = array<i64: 1, 3600>}, {transform_indices = @transform_3, window_bounds = array<i64: 8, 3600>}]} {
    %c0 = arith.constant 0 : index
    %c0_0 = arith.constant 0 : index
    %0 = vector.load %arg1[%c0, %c0_0] : memref<8x32xf32, #tpu.memory_space<vmem>>, vector<8x32xf32>
    %1 = arith.truncf %0 : vector<8x32xf32> to vector<8x32xbf16>
    %c0_1 = arith.constant 0 : index
    %c0_2 = arith.constant 0 : index
    %2 = vector.load %arg2[%c0_1, %c0_2] : memref<32x3600xbf16, #tpu.memory_space<vmem>>, vector<32x3600xbf16>
    %cst = arith.constant dense<0.000000e+00> : vector<8x3600xf32>
    %3 = tpu.matmul %1, %2, %cst {dimension_numbers = #tpu.dot_dimension_numbers<[1], [0], [0], [1], [0, 0, 1, 1], [], []>} : vector<8x32xbf16>, vector<32x3600xbf16>, vector<8x3600xf32> -> vector<8x3600xf32>
    %c0_3 = arith.constant 0 : index
    %c0_4 = arith.constant 0 : index
    %4 = vector.load %arg3[%c0_3, %c0_4] : memref<1x3600xf32, #tpu.memory_space<vmem>>, vector<1x3600xf32>
    %5 = vector.broadcast %4 : vector<1x3600xf32> to vector<8x3600xf32>
    %6 = arith.addf %3, %5 : vector<8x3600xf32>
    %c0_5 = arith.constant 0 : index
    %c0_6 = arith.constant 0 : index
    %7 = vector.load %arg4[%c0_5, %c0_6] : memref<8x3600xf32, #tpu.memory_space<vmem>>, vector<8x3600xf32>
    tpu.vector_store %arg4[%c0_5, %c0_6], %6 {strides = array<i32>} : memref<8x3600xf32, #tpu.memory_space<vmem>>, vector<8x3600xf32>,
    return
  }
  func.func @transform_0(%arg0: i32) -> (i32, i32) {
    %c0_i32 = arith.constant 0 : i32
    %c0_i32_0 = arith.constant 0 : i32
    return %arg0, %c0_i32 : i32, i32
  }
  func.func @transform_1(%arg0: i32) -> (i32, i32) {
    %c0_i32 = arith.constant 0 : i32
    %c0_i32_0 = arith.constant 0 : i32
    %c0_i32_1 = arith.constant 0 : i32
    return %c0_i32, %c0_i32_0 : i32, i32
  }
  func.func @transform_2(%arg0: i32) -> (i32, i32) {
    %c0_i32 = arith.constant 0 : i32
    %c0_i32_0 = arith.constant 0 : i32
    %c0_i32_1 = arith.constant 0 : i32
    return %c0_i32, %c0_i32_0 : i32, i32
  }
  func.func @transform_3(%arg0: i32) -> (i32, i32) {
    %c0_i32 = arith.constant 0 : i32
    %c0_i32_0 = arith.constant 0 : i32
    return %arg0, %c0_i32 : i32, i32
  }
}

</mosaic_0001>

<llo_original>
// kernel: decoder_forward.1
$region0: #{decoder_forward.1}
  #allocation0 [shape = 'u32[]', space=smem, size = 0x4, offset = 0x4, fixed_abs, tag = 'smem constant byte address 0x4 - core index']
  #allocation1 [shape = 'u32[72,128]{1,0:T(1,128)}', space=vmem, size = 0x9000, scoped, tag = 'internal scratch']
  %s0 = inlined_call_operand.vmem [shape: f32[8,32], index: 0, kind: input, shape index: {}]
  %s1 = inlined_call_operand.hbm [shape: bf16[32,3600], index: 1, kind: input, shape index: {}]
  %s2 = inlined_call_operand.hbm [shape: f32[1,3600], index: 2, kind: input, shape index: {}]
  %s3 = inlined_call_operand.vmem [shape: f32[8,3600], index: 3, kind: output, shape index: {}]
  %s4 = sld [smem:[#allocation0]]
  $region30: #{decoder_forward.1} parent=0
    _
  %s6 = ssub.s32 1, %s4
  %s7 = scalar_select 0, %s6, %s4
  $region1: #{decoder_forward.1} parent=0
    #allocation2 [shape = 'u8[237568]{0}', space=vmem, size = 0x3a000, scoped, tag = 'input window, operand 1, single buffered']
    #allocation3 [shape = 's32[1]{0}', space=sflag, size = 0x4, scoped, tag = 'scoped memory for decoder_forward.1']
    #allocation4 [shape = 'u8[14848]{0}', space=vmem, size = 0x3c00, scoped, tag = 'input window, operand 2, single buffered']
    #allocation5 [shape = 's32[1]{0}', space=sflag, size = 0x4, scoped, tag = 'scoped memory for decoder_forward.1']
    %8 = vsyncpa [#allocation3], 0
    %9 = vsyncpa [#allocation5], 0
    // Predicated region
    $region2: #{decoder_forward.1} parent=1 // pred_check
      _
    $region3: #{decoder_forward.1} parent=1 // pred_check_branch
      %11 = sbr.rel (0) target = $region5
    $region4: #{decoder_forward.1} parent=1 // pred_region
      _
    $region5: #{decoder_forward.1} parent=1 // pred_fallthru
      _
    // Predicated region
    $region6: #{decoder_forward.1} parent=1 // pred_check
      _
    $region7: #{decoder_forward.1} parent=1 // pred_check_branch
      %13 = sbr.rel (0) target = $region9
    $region8: #{decoder_forward.1} parent=1 // pred_region
      %15 = vsyncadd [#allocation3], 0
      %s16 = sshll.u32 %s1, 4
      %s17 = int_to_ptr.hbm [resolvable:$true] %s16
      %s18 = sshll.u32 [#allocation2], 4
      %s19 = int_to_ptr.vmem [resolvable:$true] %s18
      %24 = dma.hbm_to_vmem [thread:$0]  %s17, 7424, %s19, [#allocation3], 1856, 1856, 116
    $region9: #{decoder_forward.1} parent=1 // pred_fallthru
      _
    // Predicated region
    $region10: #{decoder_forward.1} parent=1 // pred_check
      _
    $region11: #{decoder_forward.1} parent=1 // pred_check_branch
      %26 = sbr.rel (0) target = $region13
    $region12: #{decoder_forward.1} parent=1 // pred_region
      %28 = vsyncadd [#allocation5], 0
      %s30 = sshll.u32 %s2, 4
      %s31 = int_to_ptr.hbm [resolvable:$true] %s30
      %s32 = sshll.u32 [#allocation4], 4
      %s33 = int_to_ptr.vmem [resolvable:$true] %s32
      %35 = dma.hbm_to_vmem [thread:$0]  %s31, 464, %s33, [#allocation5]
    $region13: #{decoder_forward.1} parent=1 // pred_fallthru
      _
    // Predicated region
    $region14: #{decoder_forward.1} parent=1 // pred_check
      _
    $region15: #{decoder_forward.1} parent=1 // pred_check_branch
      %37 = sbr.rel (0) target = $region17
    $region16: #{decoder_forward.1} parent=1 // pred_region
      %39 = dma.done [#allocation3], 7424
    $region17: #{decoder_forward.1} parent=1 // pred_fallthru
      _
    // Predicated region
    $region18: #{decoder_forward.1} parent=1 // pred_check
      _
    $region19: #{decoder_forward.1} parent=1 // pred_check_branch
      %41 = sbr.rel (0) target = $region21
    $region20: #{decoder_forward.1} parent=1 // pred_region
      %43 = dma.done [#allocation5], 464
    $region21: #{decoder_forward.1} parent=1 // pred_fallthru
      _
    %v45 = vld [vmem:[%s0] sm:$0xff]
    %v46 = vpack.c.bf16 %v45, %v45
    %v47 = vld [vmem:[#allocation2] sm:$0xff]
    %v48 = vld [vmem:[#allocation2 + $0x8] sm:$0xff]
    %v49 = vld [vmem:[#allocation2 + $0x10] sm:$0xff]
    %v50 = vld [vmem:[#allocation2 + $0x18] sm:$0xff]
    %v51 = vld [vmem:[#allocation2 + $0x20] sm:$0xff]
    %v52 = vld [vmem:[#allocation2 + $0x28] sm:$0xff]
    %v53 = vld [vmem:[#allocation2 + $0x30] sm:$0xff]
    %v54 = vld [vmem:[#allocation2 + $0x38] sm:$0xff]
    %v55 = vld [vmem:[#allocation2 + $0x40] sm:$0xff]
    %v56 = vld [vmem:[#allocation2 + $0x48] sm:$0xff]
    %v57 = vld [vmem:[#allocation2 + $0x50] sm:$0xff]
    %v58 = vld [vmem:[#allocation2 + $0x58] sm:$0xff]
    %v59 = vld [vmem:[#allocation2 + $0x60] sm:$0xff]
    %v60 = vld [vmem:[#allocation2 + $0x68] sm:$0xff]
    %v61 = vld [vmem:[#allocation2 + $0x70] sm:$0xf]
    %v62 = vld [vmem:[#allocation2 + $0x74] sm:$0xff]
    %v63 = vld [vmem:[#allocation2 + $0x7c] sm:$0xff]
    %v64 = vld [vmem:[#allocation2 + $0x84] sm:$0xff]
    %v65 = vld [vmem:[#allocation2 + $0x8c] sm:$0xff]
    %v66 = vld [vmem:[#allocation2 + $0x94] sm:$0xff]
    %v67 = vld [vmem:[#allocation2 + $0x9c] sm:$0xff]
    %v68 = vld [vmem:[#allocation2 + $0xa4] sm:$0xff]
    %v69 = vld [vmem:[#allocation2 + $0xac] sm:$0xff]
    %v70 = vld [vmem:[#allocation2 + $0xb4] sm:$0xff]
    %v71 = vld [vmem:[#allocation2 + $0xbc] sm:$0xff]
    %v72 = vld [vmem:[#allocation2 + $0xc4] sm:$0xff]
    %v73 = vld [vmem:[#allocation2 + $0xcc] sm:$0xff]
    %v74 = vld [vmem:[#allocation2 + $0xd4] sm:$0xff]
    %v75 = vld [vmem:[#allocation2 + $0xdc] sm:$0xff]
    %v76 = vld [vmem:[#allocation2 + $0xe4] sm:$0xf]
    %v77 = vld [vmem:[#allocation2 + $0xe8] sm:$0xff]
    %v78 = vld [vmem:[#allocation2 + $0xf0] sm:$0xff]
    %v79 = vld [vmem:[#allocation2 + $0xf8] sm:$0xff]
    %v80 = vld [vmem:[#allocation2 + $0x100] sm:$0xff]
    %v81 = vld [vmem:[#allocation2 + $0x108] sm:$0xff]
    %v82 = vld [vmem:[#allocation2 + $0x110] sm:$0xff]
    %v83 = vld [vmem:[#allocation2 + $0x118] sm:$0xff]
    %v84 = vld [vmem:[#allocation2 + $0x120] sm:$0xff]
    %v85 = vld [vmem:[#allocation2 + $0x128] sm:$0xff]
    %v86 = vld [vmem:[#allocation2 + $0x130] sm:$0xff]
    %v87 = vld [vmem:[#allocation2 + $0x138] sm:$0xff]
    %v88 = vld [vmem:[#allocation2 + $0x140] sm:$0xff]
    %v89 = vld [vmem:[#allocation2 + $0x148] sm:$0xff]
    %v90 = vld [vmem:[#allocation2 + $0x150] sm:$0xff]
    %v91 = vld [vmem:[#allocation2 + $0x158] sm:$0xf]
    %v92 = vld [vmem:[#allocation2 + $0x15c] sm:$0xff]
    %v93 = vld [vmem:[#allocation2 + $0x164] sm:$0xff]
    %v94 = vld [vmem:[#allocation2 + $0x16c] sm:$0xff]
    %v95 = vld [vmem:[#allocation2 + $0x174] sm:$0xff]
    %v96 = vld [vmem:[#allocation2 + $0x17c] sm:$0xff]
    %v97 = vld [vmem:[#allocation2 + $0x184] sm:$0xff]
    %v98 = vld [vmem:[#allocation2 + $0x18c] sm:$0xff]
    %v99 = vld [vmem:[#allocation2 + $0x194] sm:$0xff]
    %v100 = vld [vmem:[#allocation2 + $0x19c] sm:$0xff]
    %v101 = vld [vmem:[#allocation2 + $0x1a4] sm:$0xff]
    %v102 = vld [vmem:[#allocation2 + $0x1ac] sm:$0xff]
    %v103 = vld [vmem:[#allocation2 + $0x1b4] sm:$0xff]
    %v104 = vld [vmem:[#allocation2 + $0x1bc] sm:$0xff]
    %v105 = vld [vmem:[#allocation2 + $0x1c4] sm:$0xff]
    %v106 = vld [vmem:[#allocation2 + $0x1cc] sm:$0xf]
    %v107 = vld [vmem:[#allocation4] sm:$0xff]
    %v108 = vld [vmem:[#allocation4 + $0x8] sm:$0xff]
    %v109 = vld [vmem:[#allocation4 + $0x10] sm:$0xff]
    %v110 = vld [vmem:[#allocation4 + $0x18] sm:$0x1f]
    %v115 = vperm.slane %v107, 0
    %v116 = vperm.slane %v107, 1
    %v117 = vperm.slane %v107, 2
    %v118 = vperm.slane %v107, 3
    %v119 = vperm.slane %v107, 4
    %v120 = vperm.slane %v107, 5
    %v121 = vperm.slane %v107, 6
    %v122 = vperm.slane %v107, 7
    %v123 = vperm.slane %v108, 0
    %v124 = vperm.slane %v108, 1
    %v125 = vperm.slane %v108, 2
    %v126 = vperm.slane %v108, 3
    %v127 = vperm.slane %v108, 4
    %v128 = vperm.slane %v108, 5
    %v129 = vperm.slane %v108, 6
    %v130 = vperm.slane %v108, 7
    %v131 = vperm.slane %v109, 0
    %v132 = vperm.slane %v109, 1
    %v133 = vperm.slane %v109, 2
    %v134 = vperm.slane %v109, 3
    %v135 = vperm.slane %v109, 4
    %v136 = vperm.slane %v109, 5
    %v137 = vperm.slane %v109, 6
    %v138 = vperm.slane %v109, 7
    %v139 = vperm.slane %v110, 0
    %v140 = vperm.slane %v110, 1
    %v141 = vperm.slane %v110, 2
    %v142 = vperm.slane %v110, 3
    %v143 = vperm.slane %v110, 4
    %v233 = vunpack.c.l.b16 %v47
    %v234 = vunpack.c.h.b16 %v47
    %v235 = vunpack.c.l.b16 %v48
    %v236 = vunpack.c.h.b16 %v48
    %v237 = vunpack.c.l.b16 %v49
    %v238 = vunpack.c.h.b16 %v49
    %v239 = vunpack.c.l.b16 %v50
    %v240 = vunpack.c.h.b16 %v50
    %v241 = vunpack.c.l.b16 %v51
    %v242 = vunpack.c.h.b16 %v51
    %v243 = vunpack.c.l.b16 %v52
    %v244 = vunpack.c.h.b16 %v52
    %v245 = vunpack.c.l.b16 %v53
    %v246 = vunpack.c.h.b16 %v53
    %v247 = vunpack.c.l.b16 %v54
    %v248 = vunpack.c.h.b16 %v54
    %v249 = vunpack.c.l.b16 %v55
    %v250 = vunpack.c.h.b16 %v55
    %v251 = vunpack.c.l.b16 %v56
    %v252 = vunpack.c.h.b16 %v56
    %v253 = vunpack.c.l.b16 %v57
    %v254 = vunpack.c.h.b16 %v57
    %v255 = vunpack.c.l.b16 %v58
    %v256 = vunpack.c.h.b16 %v58
    %v257 = vunpack.c.l.b16 %v59
    %v258 = vunpack.c.h.b16 %v59
    %v259 = vunpack.c.l.b16 %v60
    %v260 = vunpack.c.h.b16 %v60
    %v261 = vunpack.c.l.b16 %v61
    %v262 = vunpack.c.l.b16 %v62
    %v263 = vunpack.c.h.b16 %v62
    %v264 = vunpack.c.l.b16 %v63
    %v265 = vunpack.c.h.b16 %v63
    %v266 = vunpack.c.l.b16 %v64
    %v267 = vunpack.c.h.b16 %v64
    %v268 = vunpack.c.l.b16 %v65
    %v269 = vunpack.c.h.b16 %v65
    %v270 = vunpack.c.l.b16 %v66
    %v271 = vunpack.c.h.b16 %v66
    %v272 = vunpack.c.l.b16 %v67
    %v273 = vunpack.c.h.b16 %v67
    %v274 = vunpack.c.l.b16 %v68
    %v275 = vunpack.c.h.b16 %v68
    %v276 = vunpack.c.l.b16 %v69
    %v277 = vunpack.c.h.b16 %v69
    %v278 = vunpack.c.l.b16 %v70
    %v279 = vunpack.c.h.b16 %v70
    %v280 = vunpack.c.l.b16 %v71
    %v281 = vunpack.c.h.b16 %v71
    %v282 = vunpack.c.l.b16 %v72
    %v283 = vunpack.c.h.b16 %v72
    %v284 = vunpack.c.l.b16 %v73
    %v285 = vunpack.c.h.b16 %v73
    %v286 = vunpack.c.l.b16 %v74
    %v287 = vunpack.c.h.b16 %v74
    %v288 = vunpack.c.l.b16 %v75
    %v289 = vunpack.c.h.b16 %v75
    %v290 = vunpack.c.l.b16 %v76
    %v291 = vunpack.c.l.b16 %v77
    %v292 = vunpack.c.h.b16 %v77
    %v293 = vunpack.c.l.b16 %v78
    %v294 = vunpack.c.h.b16 %v78
    %v295 = vunpack.c.l.b16 %v79
    %v296 = vunpack.c.h.b16 %v79
    %v297 = vunpack.c.l.b16 %v80
    %v298 = vunpack.c.h.b16 %v80
    %v299 = vunpack.c.l.b16 %v81
    %v300 = vunpack.c.h.b16 %v81
    %v301 = vunpack.c.l.b16 %v82
    %v302 = vunpack.c.h.b16 %v82
    %v303 = vunpack.c.l.b16 %v83
    %v304 = vunpack.c.h.b16 %v83
    %v305 = vunpack.c.l.b16 %v84
    %v306 = vunpack.c.h.b16 %v84
    %v307 = vunpack.c.l.b16 %v85
    %v308 = vunpack.c.h.b16 %v85
    %v309 = vunpack.c.l.b16 %v86
    %v310 = vunpack.c.h.b16 %v86
    %v311 = vunpack.c.l.b16 %v87
    %v312 = vunpack.c.h.b16 %v87
    %v313 = vunpack.c.l.b16 %v88
    %v314 = vunpack.c.h.b16 %v88
    %v315 = vunpack.c.l.b16 %v89
    %v316 = vunpack.c.h.b16 %v89
    %v317 = vunpack.c.l.b16 %v90
    %v318 = vunpack.c.h.b16 %v90
    %v319 = vunpack.c.l.b16 %v91
    %v320 = vunpack.c.l.b16 %v92
    %v321 = vunpack.c.h.b16 %v92
    %v322 = vunpack.c.l.b16 %v93
    %v323 = vunpack.c.h.b16 %v93
    %v324 = vunpack.c.l.b16 %v94
    %v325 = vunpack.c.h.b16 %v94
    %v326 = vunpack.c.l.b16 %v95
    %v327 = vunpack.c.h.b16 %v95
    %v328 = vunpack.c.l.b16 %v96
    %v329 = vunpack.c.h.b16 %v96
    %v330 = vunpack.c.l.b16 %v97
    %v331 = vunpack.c.h.b16 %v97
    %v332 = vunpack.c.l.b16 %v98
    %v333 = vunpack.c.h.b16 %v98
    %v334 = vunpack.c.l.b16 %v99
    %v335 = vunpack.c.h.b16 %v99
    %v336 = vunpack.c.l.b16 %v100
    %v337 = vunpack.c.h.b16 %v100
    %v338 = vunpack.c.l.b16 %v101
    %v339 = vunpack.c.h.b16 %v101
    %v340 = vunpack.c.l.b16 %v102
    %v341 = vunpack.c.h.b16 %v102
    %v342 = vunpack.c.l.b16 %v103
    %v343 = vunpack.c.h.b16 %v103
    %v344 = vunpack.c.l.b16 %v104
    %v345 = vunpack.c.h.b16 %v104
    %v346 = vunpack.c.l.b16 %v105
    %v347 = vunpack.c.h.b16 %v105
    %v348 = vunpack.c.l.b16 %v106
    %v349 = vpack.c.b16 %v262, %v233
    %v350 = vpack.c.b16 %v263, %v234
    %v351 = vpack.c.b16 %v264, %v235
    %v352 = vpack.c.b16 %v265, %v236
    %v353 = vpack.c.b16 %v266, %v237
    %v354 = vpack.c.b16 %v267, %v238
    %v355 = vpack.c.b16 %v268, %v239
    %v356 = vpack.c.b16 %v269, %v240
    %v357 = vpack.c.b16 %v270, %v241
    %v358 = vpack.c.b16 %v271, %v242
    %v359 = vpack.c.b16 %v272, %v243
    %v360 = vpack.c.b16 %v273, %v244
    %v361 = vpack.c.b16 %v274, %v245
    %v362 = vpack.c.b16 %v275, %v246
    %v363 = vpack.c.b16 %v276, %v247
    %v364 = vpack.c.b16 %v277, %v248
    %v365 = vpack.c.b16 %v278, %v249
    %v366 = vpack.c.b16 %v279, %v250
    %v367 = vpack.c.b16 %v280, %v251
    %v368 = vpack.c.b16 %v281, %v252
    %v369 = vpack.c.b16 %v282, %v253
    %v370 = vpack.c.b16 %v283, %v254
    %v371 = vpack.c.b16 %v284, %v255
    %v372 = vpack.c.b16 %v285, %v256
    %v373 = vpack.c.b16 %v286, %v257
    %v374 = vpack.c.b16 %v287, %v258
    %v375 = vpack.c.b16 %v288, %v259
    %v376 = vpack.c.b16 %v289, %v260
    %v377 = vpack.c.b16 %v290, %v261
    %v378 = vpack.c.b16 %v320, %v291
    %v379 = vpack.c.b16 %v321, %v292
    %v380 = vpack.c.b16 %v322, %v293
    %v381 = vpack.c.b16 %v323, %v294
    %v382 = vpack.c.b16 %v324, %v295
    %v383 = vpack.c.b16 %v325, %v296
    %v384 = vpack.c.b16 %v326, %v297
    %v385 = vpack.c.b16 %v327, %v298
    %v386 = vpack.c.b16 %v328, %v299
    %v387 = vpack.c.b16 %v329, %v300
    %v388 = vpack.c.b16 %v330, %v301
    %v389 = vpack.c.b16 %v331, %v302
    %v390 = vpack.c.b16 %v332, %v303
    %v391 = vpack.c.b16 %v333, %v304
    %v392 = vpack.c.b16 %v334, %v305
    %v393 = vpack.c.b16 %v335, %v306
    %v394 = vpack.c.b16 %v336, %v307
    %v395 = vpack.c.b16 %v337, %v308
    %v396 = vpack.c.b16 %v338, %v309
    %v397 = vpack.c.b16 %v339, %v310
    %v398 = vpack.c.b16 %v340, %v311
    %v399 = vpack.c.b16 %v341, %v312
    %v400 = vpack.c.b16 %v342, %v313
    %v401 = vpack.c.b16 %v343, %v314
    %v402 = vpack.c.b16 %v344, %v315
    %v403 = vpack.c.b16 %v345, %v316
    %v404 = vpack.c.b16 %v346, %v317
    %v405 = vpack.c.b16 %v347, %v318
    %v406 = vpack.c.b16 %v348, %v319
    %vm465 = vcmask 261120
    %v467 = vsel %vm465, %v46, 0
    %469 = vmatpush.bf16.msra.mxu0 0
    %470 = vmatpush.bf16.msra.mxu0 0
    %471 = vmatpush.bf16.msra.mxu0 0
    %472 = vmatpush.bf16.msra.mxu0 0
    %473 = vmatpush.bf16.msra.mxu0 0
    %474 = vmatpush.bf16.msra.mxu0 0
    %475 = vmatpush.bf16.msra.mxu0 %v378
    %476 = vmatpush.bf16.msra.mxu0 %v349
    %477 = vmatmul.bf16.gmra.mxu0 %v467
    %v478 = vpop.f32.mrf.mxu0
    %v479 = vadd.f32 %v115, %v478
    %v480 = vpop.f32.mrf.mxu0
    %481 = vdwg.mxu0
    %482 = vmatpush.bf16.msra.mxu0 0
    %483 = vmatpush.bf16.msra.mxu0 0
    %484 = vmatpush.bf16.msra.mxu0 0
    %485 = vmatpush.bf16.msra.mxu0 0
    %486 = vmatpush.bf16.msra.mxu0 0
    %487 = vmatpush.bf16.msra.mxu0 0
    %488 = vmatpush.bf16.msra.mxu0 %v379
    %489 = vmatpush.bf16.msra.mxu0 %v350
    %490 = vmatmul.bf16.gmra.mxu0 %v467
    %v491 = vpop.f32.mrf.mxu0
    %v492 = vadd.f32 %v116, %v491
    %v493 = vpop.f32.mrf.mxu0
    %494 = vdwg.mxu0
    %495 = vmatpush.bf16.msra.mxu0 0
    %496 = vmatpush.bf16.msra.mxu0 0
    %497 = vmatpush.bf16.msra.mxu0 0
    %498 = vmatpush.bf16.msra.mxu0 0
    %499 = vmatpush.bf16.msra.mxu0 0
    %500 = vmatpush.bf16.msra.mxu0 0
    %501 = vmatpush.bf16.msra.mxu0 %v380
    %502 = vmatpush.bf16.msra.mxu0 %v351
    %503 = vmatmul.bf16.gmra.mxu0 %v467
    %v504 = vpop.f32.mrf.mxu0
    %v505 = vadd.f32 %v117, %v504
    %v506 = vpop.f32.mrf.mxu0
    %507 = vdwg.mxu0
    %508 = vmatpush.bf16.msra.mxu0 0
    %509 = vmatpush.bf16.msra.mxu0 0
    %510 = vmatpush.bf16.msra.mxu0 0
    %511 = vmatpush.bf16.msra.mxu0 0
    %512 = vmatpush.bf16.msra.mxu0 0
    %513 = vmatpush.bf16.msra.mxu0 0
    %514 = vmatpush.bf16.msra.mxu0 %v381
    %515 = vmatpush.bf16.msra.mxu0 %v352
    %516 = vmatmul.bf16.gmra.mxu0 %v467
    %v517 = vpop.f32.mrf.mxu0
    %v518 = vadd.f32 %v118, %v517
    %v519 = vpop.f32.mrf.mxu0
    %520 = vdwg.mxu0
    %521 = vmatpush.bf16.msra.mxu0 0
    %522 = vmatpush.bf16.msra.mxu0 0
    %523 = vmatpush.bf16.msra.mxu0 0
    %524 = vmatpush.bf16.msra.mxu0 0
    %525 = vmatpush.bf16.msra.mxu0 0
    %526 = vmatpush.bf16.msra.mxu0 0
    %527 = vmatpush.bf16.msra.mxu0 %v382
    %528 = vmatpush.bf16.msra.mxu0 %v353
    %529 = vmatmul.bf16.gmra.mxu0 %v467
    %v530 = vpop.f32.mrf.mxu0
    %v531 = vadd.f32 %v119, %v530
    %v532 = vpop.f32.mrf.mxu0
    %533 = vdwg.mxu0
    %534 = vmatpush.bf16.msra.mxu0 0
    %535 = vmatpush.bf16.msra.mxu0 0
    %536 = vmatpush.bf16.msra.mxu0 0
    %537 = vmatpush.bf16.msra.mxu0 0
    %538 = vmatpush.bf16.msra.mxu0 0
    %539 = vmatpush.bf16.msra.mxu0 0
    %540 = vmatpush.bf16.msra.mxu0 %v383
    %541 = vmatpush.bf16.msra.mxu0 %v354
    %542 = vmatmul.bf16.gmra.mxu0 %v467
    %v543 = vpop.f32.mrf.mxu0
    %v544 = vadd.f32 %v120, %v543
    %v545 = vpop.f32.mrf.mxu0
    %546 = vdwg.mxu0
    %547 = vmatpush.bf16.msra.mxu0 0
    %548 = vmatpush.bf16.msra.mxu0 0
    %549 = vmatpush.bf16.msra.mxu0 0
    %550 = vmatpush.bf16.msra.mxu0 0
    %551 = vmatpush.bf16.msra.mxu0 0
    %552 = vmatpush.bf16.msra.mxu0 0
    %553 = vmatpush.bf16.msra.mxu0 %v384
    %554 = vmatpush.bf16.msra.mxu0 %v355
    %555 = vmatmul.bf16.gmra.mxu0 %v467
    %v556 = vpop.f32.mrf.mxu0
    %v557 = vadd.f32 %v121, %v556
    %v558 = vpop.f32.mrf.mxu0
    %559 = vdwg.mxu0
    %560 = vmatpush.bf16.msra.mxu0 0
    %561 = vmatpush.bf16.msra.mxu0 0
    %562 = vmatpush.bf16.msra.mxu0 0
    %563 = vmatpush.bf16.msra.mxu0 0
    %564 = vmatpush.bf16.msra.mxu0 0
    %565 = vmatpush.bf16.msra.mxu0 0
    %566 = vmatpush.bf16.msra.mxu0 %v385
    %567 = vmatpush.bf16.msra.mxu0 %v356
    %568 = vmatmul.bf16.gmra.mxu0 %v467
    %v569 = vpop.f32.mrf.mxu0
    %v570 = vadd.f32 %v122, %v569
    %v571 = vpop.f32.mrf.mxu0
    %572 = vdwg.mxu0
    %573 = vmatpush.bf16.msra.mxu0 0
    %574 = vmatpush.bf16.msra.mxu0 0
    %575 = vmatpush.bf16.msra.mxu0 0
    %576 = vmatpush.bf16.msra.mxu0 0
    %577 = vmatpush.bf16.msra.mxu0 0
    %578 = vmatpush.bf16.msra.mxu0 0
    %579 = vmatpush.bf16.msra.mxu0 %v386
    %580 = vmatpush.bf16.msra.mxu0 %v357
    %581 = vmatmul.bf16.gmra.mxu0 %v467
    %v582 = vpop.f32.mrf.mxu0
    %v583 = vadd.f32 %v123, %v582
    %v584 = vpop.f32.mrf.mxu0
    %585 = vdwg.mxu0
    %586 = vmatpush.bf16.msra.mxu0 0
    %587 = vmatpush.bf16.msra.mxu0 0
    %588 = vmatpush.bf16.msra.mxu0 0
    %589 = vmatpush.bf16.msra.mxu0 0
    %590 = vmatpush.bf16.msra.mxu0 0
    %591 = vmatpush.bf16.msra.mxu0 0
    %592 = vmatpush.bf16.msra.mxu0 %v387
    %593 = vmatpush.bf16.msra.mxu0 %v358
    %594 = vmatmul.bf16.gmra.mxu0 %v467
    %v595 = vpop.f32.mrf.mxu0
    %v596 = vadd.f32 %v124, %v595
    %v597 = vpop.f32.mrf.mxu0
    %598 = vdwg.mxu0
    %599 = vmatpush.bf16.msra.mxu0 0
    %600 = vmatpush.bf16.msra.mxu0 0
    %601 = vmatpush.bf16.msra.mxu0 0
    %602 = vmatpush.bf16.msra.mxu0 0
    %603 = vmatpush.bf16.msra.mxu0 0
    %604 = vmatpush.bf16.msra.mxu0 0
    %605 = vmatpush.bf16.msra.mxu0 %v388
    %606 = vmatpush.bf16.msra.mxu0 %v359
    %607 = vmatmul.bf16.gmra.mxu0 %v467
    %v608 = vpop.f32.mrf.mxu0
    %v609 = vadd.f32 %v125, %v608
    %v610 = vpop.f32.mrf.mxu0
    %611 = vdwg.mxu0
    %612 = vmatpush.bf16.msra.mxu0 0
    %613 = vmatpush.bf16.msra.mxu0 0
    %614 = vmatpush.bf16.msra.mxu0 0
    %615 = vmatpush.bf16.msra.mxu0 0
    %616 = vmatpush.bf16.msra.mxu0 0
    %617 = vmatpush.bf16.msra.mxu0 0
    %618 = vmatpush.bf16.msra.mxu0 %v389
    %619 = vmatpush.bf16.msra.mxu0 %v360
    %620 = vmatmul.bf16.gmra.mxu0 %v467
    %v621 = vpop.f32.mrf.mxu0
    %v622 = vadd.f32 %v126, %v621
    %v623 = vpop.f32.mrf.mxu0
    %624 = vdwg.mxu0
    %625 = vmatpush.bf16.msra.mxu0 0
    %626 = vmatpush.bf16.msra.mxu0 0
    %627 = vmatpush.bf16.msra.mxu0 0
    %628 = vmatpush.bf16.msra.mxu0 0
    %629 = vmatpush.bf16.msra.mxu0 0
    %630 = vmatpush.bf16.msra.mxu0 0
    %631 = vmatpush.bf16.msra.mxu0 %v390
    %632 = vmatpush.bf16.msra.mxu0 %v361
    %633 = vmatmul.bf16.gmra.mxu0 %v467
    %v634 = vpop.f32.mrf.mxu0
    %v635 = vadd.f32 %v127, %v634
    %v636 = vpop.f32.mrf.mxu0
    %637 = vdwg.mxu0
    %638 = vmatpush.bf16.msra.mxu0 0
    %639 = vmatpush.bf16.msra.mxu0 0
    %640 = vmatpush.bf16.msra.mxu0 0
    %641 = vmatpush.bf16.msra.mxu0 0
    %642 = vmatpush.bf16.msra.mxu0 0
    %643 = vmatpush.bf16.msra.mxu0 0
    %644 = vmatpush.bf16.msra.mxu0 %v391
    %645 = vmatpush.bf16.msra.mxu0 %v362
    %646 = vmatmul.bf16.gmra.mxu0 %v467
    %v647 = vpop.f32.mrf.mxu0
    %v648 = vadd.f32 %v128, %v647
    %v649 = vpop.f32.mrf.mxu0
    %650 = vdwg.mxu0
    %651 = vmatpush.bf16.msra.mxu0 0
    %652 = vmatpush.bf16.msra.mxu0 0
    %653 = vmatpush.bf16.msra.mxu0 0
    %654 = vmatpush.bf16.msra.mxu0 0
    %655 = vmatpush.bf16.msra.mxu0 0
    %656 = vmatpush.bf16.msra.mxu0 0
    %657 = vmatpush.bf16.msra.mxu0 %v392
    %658 = vmatpush.bf16.msra.mxu0 %v363
    %659 = vmatmul.bf16.gmra.mxu0 %v467
    %v660 = vpop.f32.mrf.mxu0
    %v661 = vadd.f32 %v129, %v660
    %v662 = vpop.f32.mrf.mxu0
    %663 = vdwg.mxu0
    %664 = vmatpush.bf16.msra.mxu0 0
    %665 = vmatpush.bf16.msra.mxu0 0
    %666 = vmatpush.bf16.msra.mxu0 0
    %667 = vmatpush.bf16.msra.mxu0 0
    %668 = vmatpush.bf16.msra.mxu0 0
    %669 = vmatpush.bf16.msra.mxu0 0
    %670 = vmatpush.bf16.msra.mxu0 %v393
    %671 = vmatpush.bf16.msra.mxu0 %v364
    %672 = vmatmul.bf16.gmra.mxu0 %v467
    %v673 = vpop.f32.mrf.mxu0
    %v674 = vadd.f32 %v130, %v673
    %v675 = vpop.f32.mrf.mxu0
    %676 = vdwg.mxu0
    %677 = vmatpush.bf16.msra.mxu0 0
    %678 = vmatpush.bf16.msra.mxu0 0
    %679 = vmatpush.bf16.msra.mxu0 0
    %680 = vmatpush.bf16.msra.mxu0 0
    %681 = vmatpush.bf16.msra.mxu0 0
    %682 = vmatpush.bf16.msra.mxu0 0
    %683 = vmatpush.bf16.msra.mxu0 %v394
    %684 = vmatpush.bf16.msra.mxu0 %v365
    %685 = vmatmul.bf16.gmra.mxu0 %v467
    %v686 = vpop.f32.mrf.mxu0
    %v687 = vadd.f32 %v131, %v686
    %v688 = vpop.f32.mrf.mxu0
    %689 = vdwg.mxu0
    %690 = vmatpush.bf16.msra.mxu0 0
    %691 = vmatpush.bf16.msra.mxu0 0
    %692 = vmatpush.bf16.msra.mxu0 0
    %693 = vmatpush.bf16.msra.mxu0 0
    %694 = vmatpush.bf16.msra.mxu0 0
    %695 = vmatpush.bf16.msra.mxu0 0
    %696 = vmatpush.bf16.msra.mxu0 %v395
    %697 = vmatpush.bf16.msra.mxu0 %v366
    %698 = vmatmul.bf16.gmra.mxu0 %v467
    %v699 = vpop.f32.mrf.mxu0
    %v700 = vadd.f32 %v132, %v699
    %v701 = vpop.f32.mrf.mxu0
    %702 = vdwg.mxu0
    %703 = vmatpush.bf16.msra.mxu0 0
    %704 = vmatpush.bf16.msra.mxu0 0
    %705 = vmatpush.bf16.msra.mxu0 0
    %706 = vmatpush.bf16.msra.mxu0 0
    %707 = vmatpush.bf16.msra.mxu0 0
    %708 = vmatpush.bf16.msra.mxu0 0
    %709 = vmatpush.bf16.msra.mxu0 %v396
    %710 = vmatpush.bf16.msra.mxu0 %v367
    %711 = vmatmul.bf16.gmra.mxu0 %v467
    %v712 = vpop.f32.mrf.mxu0
    %v713 = vadd.f32 %v133, %v712
    %v714 = vpop.f32.mrf.mxu0
    %715 = vdwg.mxu0
    %716 = vmatpush.bf16.msra.mxu0 0
    %717 = vmatpush.bf16.msra.mxu0 0
    %718 = vmatpush.bf16.msra.mxu0 0
    %719 = vmatpush.bf16.msra.mxu0 0
    %720 = vmatpush.bf16.msra.mxu0 0
    %721 = vmatpush.bf16.msra.mxu0 0
    %722 = vmatpush.bf16.msra.mxu0 %v397
    %723 = vmatpush.bf16.msra.mxu0 %v368
    %724 = vmatmul.bf16.gmra.mxu0 %v467
    %v725 = vpop.f32.mrf.mxu0
    %v726 = vadd.f32 %v134, %v725
    %v727 = vpop.f32.mrf.mxu0
    %728 = vdwg.mxu0
    %729 = vmatpush.bf16.msra.mxu0 0
    %730 = vmatpush.bf16.msra.mxu0 0
    %731 = vmatpush.bf16.msra.mxu0 0
    %732 = vmatpush.bf16.msra.mxu0 0
    %733 = vmatpush.bf16.msra.mxu0 0
    %734 = vmatpush.bf16.msra.mxu0 0
    %735 = vmatpush.bf16.msra.mxu0 %v398
    %736 = vmatpush.bf16.msra.mxu0 %v369
    %737 = vmatmul.bf16.gmra.mxu0 %v467
    %v738 = vpop.f32.mrf.mxu0
    %v739 = vadd.f32 %v135, %v738
    %v740 = vpop.f32.mrf.mxu0
    %741 = vdwg.mxu0
    %742 = vmatpush.bf16.msra.mxu0 0
    %743 = vmatpush.bf16.msra.mxu0 0
    %744 = vmatpush.bf16.msra.mxu0 0
    %745 = vmatpush.bf16.msra.mxu0 0
    %746 = vmatpush.bf16.msra.mxu0 0
    %747 = vmatpush.bf16.msra.mxu0 0
    %748 = vmatpush.bf16.msra.mxu0 %v399
    %749 = vmatpush.bf16.msra.mxu0 %v370
    %750 = vmatmul.bf16.gmra.mxu0 %v467
    %v751 = vpop.f32.mrf.mxu0
    %v752 = vadd.f32 %v136, %v751
    %v753 = vpop.f32.mrf.mxu0
    %754 = vdwg.mxu0
    %755 = vmatpush.bf16.msra.mxu0 0
    %756 = vmatpush.bf16.msra.mxu0 0
    %757 = vmatpush.bf16.msra.mxu0 0
    %758 = vmatpush.bf16.msra.mxu0 0
    %759 = vmatpush.bf16.msra.mxu0 0
    %760 = vmatpush.bf16.msra.mxu0 0
    %761 = vmatpush.bf16.msra.mxu0 %v400
    %762 = vmatpush.bf16.msra.mxu0 %v371
    %763 = vmatmul.bf16.gmra.mxu0 %v467
    %v764 = vpop.f32.mrf.mxu0
    %v765 = vadd.f32 %v137, %v764
    %v766 = vpop.f32.mrf.mxu0
    %767 = vdwg.mxu0
    %768 = vmatpush.bf16.msra.mxu0 0
    %769 = vmatpush.bf16.msra.mxu0 0
    %770 = vmatpush.bf16.msra.mxu0 0
    %771 = vmatpush.bf16.msra.mxu0 0
    %772 = vmatpush.bf16.msra.mxu0 0
    %773 = vmatpush.bf16.msra.mxu0 0
    %774 = vmatpush.bf16.msra.mxu0 %v401
    %775 = vmatpush.bf16.msra.mxu0 %v372
    %776 = vmatmul.bf16.gmra.mxu0 %v467
    %v777 = vpop.f32.mrf.mxu0
    %v778 = vadd.f32 %v138, %v777
    %v779 = vpop.f32.mrf.mxu0
    %780 = vdwg.mxu0
    %781 = vmatpush.bf16.msra.mxu0 0
    %782 = vmatpush.bf16.msra.mxu0 0
    %783 = vmatpush.bf16.msra.mxu0 0
    %784 = vmatpush.bf16.msra.mxu0 0
    %785 = vmatpush.bf16.msra.mxu0 0
    %786 = vmatpush.bf16.msra.mxu0 0
    %787 = vmatpush.bf16.msra.mxu0 %v402
    %788 = vmatpush.bf16.msra.mxu0 %v373
    %789 = vmatmul.bf16.gmra.mxu0 %v467
    %v790 = vpop.f32.mrf.mxu0
    %v791 = vadd.f32 %v139, %v790
    %v792 = vpop.f32.mrf.mxu0
    %793 = vdwg.mxu0
    %794 = vmatpush.bf16.msra.mxu0 0
    %795 = vmatpush.bf16.msra.mxu0 0
    %796 = vmatpush.bf16.msra.mxu0 0
    %797 = vmatpush.bf16.msra.mxu0 0
    %798 = vmatpush.bf16.msra.mxu0 0
    %799 = vmatpush.bf16.msra.mxu0 0
    %800 = vmatpush.bf16.msra.mxu0 %v403
    %801 = vmatpush.bf16.msra.mxu0 %v374
    %802 = vmatmul.bf16.gmra.mxu0 %v467
    %v803 = vpop.f32.mrf.mxu0
    %v804 = vadd.f32 %v140, %v803
    %v805 = vpop.f32.mrf.mxu0
    %806 = vdwg.mxu0
    %807 = vmatpush.bf16.msra.mxu0 0
    %808 = vmatpush.bf16.msra.mxu0 0
    %809 = vmatpush.bf16.msra.mxu0 0
    %810 = vmatpush.bf16.msra.mxu0 0
    %811 = vmatpush.bf16.msra.mxu0 0
    %812 = vmatpush.bf16.msra.mxu0 0
    %813 = vmatpush.bf16.msra.mxu0 %v404
    %814 = vmatpush.bf16.msra.mxu0 %v375
    %815 = vmatmul.bf16.gmra.mxu0 %v467
    %v816 = vpop.f32.mrf.mxu0
    %v817 = vadd.f32 %v141, %v816
    %v818 = vpop.f32.mrf.mxu0
    %819 = vdwg.mxu0
    %820 = vmatpush.bf16.msra.mxu0 0
    %821 = vmatpush.bf16.msra.mxu0 0
    %822 = vmatpush.bf16.msra.mxu0 0
    %823 = vmatpush.bf16.msra.mxu0 0
    %824 = vmatpush.bf16.msra.mxu0 0
    %825 = vmatpush.bf16.msra.mxu0 0
    %826 = vmatpush.bf16.msra.mxu0 %v405
    %827 = vmatpush.bf16.msra.mxu0 %v376
    %828 = vmatmul.bf16.gmra.mxu0 %v467
    %v829 = vpop.f32.mrf.mxu0
    %v830 = vadd.f32 %v142, %v829
    %v831 = vpop.f32.mrf.mxu0
    %832 = vdwg.mxu0
    %833 = vmatpush.bf16.msra.mxu0 0
    %834 = vmatpush.bf16.msra.mxu0 0
    %835 = vmatpush.bf16.msra.mxu0 0
    %836 = vmatpush.bf16.msra.mxu0 0
    %837 = vmatpush.bf16.msra.mxu0 0
    %838 = vmatpush.bf16.msra.mxu0 0
    %839 = vmatpush.bf16.msra.mxu0 %v406
    %840 = vmatpush.bf16.msra.mxu0 %v377
    %841 = vmatmul.bf16.gmra.mxu0 %v467
    %v842 = vpop.f32.mrf.mxu0
    %v843 = vadd.f32 %v143, %v842
    %v844 = vpop.f32.mrf.mxu0
    %845 = vdwg.mxu0
    %846 = vst [vmem:[%s3] sm:$0xff] %v479
    %847 = vst [vmem:[%s3 + $0x8] sm:$0xff] %v492
    %848 = vst [vmem:[%s3 + $0x10] sm:$0xff] %v505
    %849 = vst [vmem:[%s3 + $0x18] sm:$0xff] %v518
    %850 = vst [vmem:[%s3 + $0x20] sm:$0xff] %v531
    %851 = vst [vmem:[%s3 + $0x28] sm:$0xff] %v544
    %852 = vst [vmem:[%s3 + $0x30] sm:$0xff] %v557
    %853 = vst [vmem:[%s3 + $0x38] sm:$0xff] %v570
    %854 = vst [vmem:[%s3 + $0x40] sm:$0xff] %v583
    %855 = vst [vmem:[%s3 + $0x48] sm:$0xff] %v596
    %856 = vst [vmem:[%s3 + $0x50] sm:$0xff] %v609
    %857 = vst [vmem:[%s3 + $0x58] sm:$0xff] %v622
    %858 = vst [vmem:[%s3 + $0x60] sm:$0xff] %v635
    %859 = vst [vmem:[%s3 + $0x68] sm:$0xff] %v648
    %860 = vst [vmem:[%s3 + $0x70] sm:$0xff] %v661
    %861 = vst [vmem:[%s3 + $0x78] sm:$0xff] %v674
    %862 = vst [vmem:[%s3 + $0x80] sm:$0xff] %v687
    %863 = vst [vmem:[%s3 + $0x88] sm:$0xff] %v700
    %864 = vst [vmem:[%s3 + $0x90] sm:$0xff] %v713
    %865 = vst [vmem:[%s3 + $0x98] sm:$0xff] %v726
    %866 = vst [vmem:[%s3 + $0xa0] sm:$0xff] %v739
    %867 = vst [vmem:[%s3 + $0xa8] sm:$0xff] %v752
    %868 = vst [vmem:[%s3 + $0xb0] sm:$0xff] %v765
    %869 = vst [vmem:[%s3 + $0xb8] sm:$0xff] %v778
    %870 = vst [vmem:[%s3 + $0xc0] sm:$0xff] %v791
    %871 = vst [vmem:[%s3 + $0xc8] sm:$0xff] %v804
    %872 = vst [vmem:[%s3 + $0xd0] sm:$0xff] %v817
    %873 = vst [vmem:[%s3 + $0xd8] sm:$0xff] %v830
    %vm874 = vcmask 130048
    %875 = vst.msk [vmem:[%s3 + $0xe0] sm:$0xff] %vm874, %v843
    // Predicated region
    $region22: #{decoder_forward.1} parent=1 // pred_check
      _
    $region23: #{decoder_forward.1} parent=1 // pred_check_branch
      %877 = sbr.rel (0) target = $region25
    $region24: #{decoder_forward.1} parent=1 // pred_region
      _
    $region25: #{decoder_forward.1} parent=1 // pred_fallthru
      _
    // Predicated region
    $region26: #{decoder_forward.1} parent=1 // pred_check
      _
    $region27: #{decoder_forward.1} parent=1 // pred_check_branch
      %879 = sbr.rel (0) target = $region29
    $region28: #{decoder_forward.1} parent=1 // pred_region
      _
    $region29: #{decoder_forward.1} parent=1 // pred_fallthru
      _
    %880 = vsyncpa [#allocation3], 1
    %881 = vsyncpa [#allocation5], 1

</llo_original>
